<compile_context>
chip_gen: v7x
topology: tpu7x:2x2x1
jax: 0.10.0
libtpu: 0.0.40
codegen_flags: <defaults>
</compile_context>

<pallas_src>
import math
from functools import partial

import jax
import jax.numpy as jnp
from jax import lax
from jax.experimental import pallas as pl
from jax.experimental.pallas import tpu as pltpu


# ------------------------ Generation-aware sizing --------------------------- #
def _vmem_limit_bytes():
    """~70% of the chip's per-core VMEM (128 MiB v5e/v6e, 64 MiB v7x).
    Falls back to a v7x-safe value if the query is unavailable."""
    cap = 64 * 1024 * 1024
    try:
        info = pltpu.get_tpu_info()
        cap = int(getattr(info, "vmem_capacity_bytes", cap))
    except Exception:
        pass
    return int(cap * 0.70)


def _tile(dim, target, quantum):
    """Largest tile <= target that divides `dim` and is a multiple of
    `quantum` (8 for the sublane axis); falls back to the full dim (always a
    legal BlockSpec block)."""
    # TODO(synk): the full-dim fallback can exceed the VMEM budget for huge,
    # awkwardly-sized inputs; a pad-and-mask path would be needed there.
    if dim <= target:
        return dim
    t = (target // quantum) * quantum
    while t >= quantum:
        if dim % t == 0:
            return t
        t -= quantum
    return dim


def _proj_row_tile(M, vmem_limit):
    target = 512 if vmem_limit >= 80 * 1024 * 1024 else 256
    return _tile(M, target, 8)


def _attn_seq_tiles(S, n_heads, vmem_limit):
    target = 256 if vmem_limit >= 80 * 1024 * 1024 else 128
    # Bound the in-kernel (H, tq, tk) f32 score/prob temporaries (~3 live).
    while target > 128 and n_heads * target * target * 4 * 3 > vmem_limit // 4:
        target //= 2
    return _tile(S, target, 8), _tile(S, target, 8)


def _seq_tile(S, vmem_limit):
    target = 512 if vmem_limit >= 80 * 1024 * 1024 else 256
    return _tile(S, target, 8)


def _dot_wT(x, w_bf16):
    """x @ W^T with W kept in PyTorch (out, in) layout (no host transpose).
    bf16 MXU operands, f32 accumulation."""
    return lax.dot_general(
        x.astype(jnp.bfloat16), w_bf16,
        dimension_numbers=(((1,), (1,)), ((), ())),
        preferred_element_type=jnp.float32)


# -------------------- Fused K/V projection (mask=False) --------------------- #
def _kv_proj_kernel(key_ref, val_ref, wk_ref, bk_ref, wv_ref, bv_ref,
                    k_out_ref, v_out_ref):
    k_out_ref[...] = (_dot_wT(key_ref[...], wk_ref[...]) + bk_ref[...]
                      ).astype(jnp.bfloat16)
    v_out_ref[...] = (_dot_wT(val_ref[...], wv_ref[...]) + bv_ref[...]
                      ).astype(jnp.bfloat16)


def _kv_projection(key, value, params, vmem_limit):
    """Both K and V projections in ONE pallas_call; (E, E) weights stay
    resident (constant index maps -> DMA'd once).  Outputs are bf16 (half the
    HBM bytes for the intermediate; they are MXU operands downstream)."""
    B, S, E = key.shape
    M = B * S
    tm = _proj_row_tile(M, vmem_limit)
    const = lambda i: (0, 0)
    row = lambda i: (i, 0)
    k_proj, v_proj = pl.pallas_call(
        _kv_proj_kernel,
        out_shape=(jax.ShapeDtypeStruct((M, E), jnp.bfloat16),
                   jax.ShapeDtypeStruct((M, E), jnp.bfloat16)),
        grid=(M // tm,),
        in_specs=[
            pl.BlockSpec((tm, E), row),
            pl.BlockSpec((tm, E), row),
            pl.BlockSpec((E, E), const),
            pl.BlockSpec((1, E), const),
            pl.BlockSpec((E, E), const),
            pl.BlockSpec((1, E), const),
        ],
        out_specs=(pl.BlockSpec((tm, E), row),
                   pl.BlockSpec((tm, E), row)),
        compiler_params=pltpu.CompilerParams(
            dimension_semantics=("parallel",),
            vmem_limit_bytes=vmem_limit,
        ),
    )(key.reshape(M, E), value.reshape(M, E),
      params["w_k"].astype(jnp.bfloat16), params["b_k"].reshape(1, E),
      params["w_v"].astype(jnp.bfloat16), params["b_v"].reshape(1, E))
    return k_proj.reshape(B, S, E), v_proj.reshape(B, S, E)


# --------- Fused Q-proj + flash attention + head merge + O-proj ------------- #
def _flash_mha_kernel(q_raw_ref, k_ref, v_ref, wq_ref, bq_ref, wo_ref, bo_ref,
                      o_ref, q_sc, m_sc, l_sc, acc_sc, *, causal, scale):
    qi = pl.program_id(1)
    ki = pl.program_id(2)
    H, tq, D = q_sc.shape
    tk = k_ref.shape[1]

    @pl.when(ki == 0)
    def _():
        # Fused Q projection; 1/sqrt(d_k) folded into q (O(S*E) multiplies,
        # not O(H*S^2) on the scores).
        qp = (_dot_wT(q_raw_ref[0], wq_ref[...]) + bq_ref[...]) * scale
        q_sc[...] = jnp.transpose(qp.reshape(tq, H, D), (1, 0, 2)
                                  ).astype(jnp.bfloat16)
        m_sc[...] = jnp.full_like(m_sc, -jnp.inf)
        l_sc[...] = jnp.zeros_like(l_sc)
        acc_sc[...] = jnp.zeros_like(acc_sc)

    def kv_step():
        # In-kernel head split of the lane-dense (tk, E) K/V tiles.
        k = jnp.transpose(k_ref[0].reshape(tk, H, D), (1, 0, 2))   # (H, tk, D)
        v = jnp.transpose(v_ref[0].reshape(tk, H, D), (1, 0, 2))
        s = jnp.einsum("hqd,hkd->hqk", q_sc[...], k,
                       preferred_element_type=jnp.float32)         # (H, tq, tk)
        if causal:
            row = qi * tq + lax.broadcasted_iota(jnp.int32, (tq, tk), 0)
            col = ki * tk + lax.broadcasted_iota(jnp.int32, (tq, tk), 1)
            s = jnp.where((col > row)[None, :, :], jnp.float32(-10000.0), s)
        m_new = jnp.maximum(m_sc[...], jnp.max(s, axis=-1, keepdims=True))
        alpha = jnp.exp(m_sc[...] - m_new)
        p = jnp.exp(s - m_new)
        l_sc[...] = alpha * l_sc[...] + jnp.sum(p, axis=-1, keepdims=True)
        acc_sc[...] = alpha * acc_sc[...] + jnp.einsum(
            "hqk,hkd->hqd", p.astype(jnp.bfloat16), v,
            preferred_element_type=jnp.float32)
        m_sc[...] = m_new

    if causal:
        # Skip KV tiles lying entirely above the diagonal (~halves MXU work).
        @pl.when(ki * tk <= qi * tq + (tq - 1))
        def _():
            kv_step()
    else:
        kv_step()

    @pl.when(ki == pl.num_programs(2) - 1)
    def _():
        # Exact divide (not the approx EUP reciprocal) keeps softmax accuracy.
        out = acc_sc[...] / l_sc[...]                               # (H, tq, D)
        merged = jnp.transpose(out, (1, 0, 2)).reshape(tq, H * D)   # lane-dense
        o_ref[0] = _dot_wT(merged, wo_ref[...]) + bo_ref[...]       # fused W_o


def _flash_forward(query, key, value, params, n_heads, causal, vmem_limit):
    B, S, E = query.shape
    D = E // n_heads
    k_proj, v_proj = _kv_projection(key, value, params, vmem_limit)
    tq, tk = _attn_seq_tiles(S, n_heads, vmem_limit)
    kern = partial(_flash_mha_kernel, causal=causal, scale=1.0 / math.sqrt(D))
    const = lambda b, qi, ki: (0, 0)
    q_map = lambda b, qi, ki: (b, qi, 0)
    kv_map = lambda b, qi, ki: (b, ki, 0)
    # TODO(synk): on v5e, if xprof shows exposed KV DMA, add
    # pipeline_mode=pl.Buffered(3) on the k/v BlockSpecs.
    return pl.pallas_call(
        kern,
        out_shape=jax.ShapeDtypeStruct((B, S, E), jnp.float32),
        grid=(B, S // tq, S // tk),
        in_specs=[
            pl.BlockSpec((1, tq, E), q_map),     # raw query (f32)
            pl.BlockSpec((1, tk, E), kv_map),    # projected K (bf16)
            pl.BlockSpec((1, tk, E), kv_map),    # projected V (bf16)
            pl.BlockSpec((E, E), const),         # W_q (bf16, resident)
            pl.BlockSpec((1, E), const),         # b_q (f32)
            pl.BlockSpec((E, E), const),         # W_o (bf16, resident)
            pl.BlockSpec((1, E), const),         # b_o (f32)
        ],
        out_specs=pl.BlockSpec((1, tq, E), q_map),
        scratch_shapes=[
            pltpu.VMEM((n_heads, tq, D), jnp.bfloat16),   # scaled projected Q
            pltpu.VMEM((n_heads, tq, 1), jnp.float32),    # running max
            pltpu.VMEM((n_heads, tq, 1), jnp.float32),    # running denom
            pltpu.VMEM((n_heads, tq, D), jnp.float32),    # running numerator
        ],
        compiler_params=pltpu.CompilerParams(
            dimension_semantics=("parallel", "parallel", "arbitrary"),
            vmem_limit_bytes=vmem_limit,
        ),
    )(query, k_proj, v_proj,
      params["w_q"].astype(jnp.bfloat16), params["b_q"].reshape(1, E),
      params["w_o"].astype(jnp.bfloat16), params["b_o"].reshape(1, E))


# ------------------- Fully-fused forward for mask=True ---------------------- #
def _masked_mha_kernel(v_in_ref, wv_ref, bv_ref, wo_ref, bo_ref, o_ref, sum_sc):
    si = pl.program_id(1)
    ts = v_in_ref.shape[1]

    @pl.when(si == 0)
    def _():
        sum_sc[...] = jnp.zeros_like(sum_sc)

    # V projection of this row tile (bf16 MXU, f32 accumulate).
    v = _dot_wT(v_in_ref[0], wv_ref[...]) + bv_ref[...]             # (ts, E)
    # Inclusive within-tile prefix sum via a small lower-triangular matmul
    # (O(ts^2*E) instead of the O(S^2*E) global averaging matmul), plus the
    # f32 running sum carried across row tiles in VMEM scratch.
    r = lax.broadcasted_iota(jnp.int32, (ts, ts), 0)
    c = lax.broadcasted_iota(jnp.int32, (ts, ts), 1)
    tri = (c <= r).astype(jnp.bfloat16)
    csum = jnp.dot(tri, v.astype(jnp.bfloat16),
                   preferred_element_type=jnp.float32) + sum_sc[...]
    sum_sc[...] = csum[ts - 1:ts, :]                                # new carry
    rows = si * ts + lax.broadcasted_iota(jnp.int32, (ts, 1), 0)
    mean = csum / (rows + 1).astype(jnp.float32)                    # prefix mean
    # Fused output projection.
    o_ref[0] = _dot_wT(mean, wo_ref[...]) + bo_ref[...]


def _masked_forward(value, params, vmem_limit):
    B, S, E = value.shape
    ts = _seq_tile(S, vmem_limit)
    const = lambda b, si: (0, 0)
    blk = lambda b, si: (b, si, 0)
    return pl.pallas_call(
        _masked_mha_kernel,
        out_shape=jax.ShapeDtypeStruct((B, S, E), jnp.float32),
        grid=(B, S // ts),
        in_specs=[
            pl.BlockSpec((1, ts, E), blk),
            pl.BlockSpec((E, E), const),
            pl.BlockSpec((1, E), const),
            pl.BlockSpec((E, E), const),
            pl.BlockSpec((1, E), const),
        ],
        out_specs=pl.BlockSpec((1, ts, E), blk),
        scratch_shapes=[pltpu.VMEM((1, E), jnp.float32)],           # running sum
        compiler_params=pltpu.CompilerParams(
            dimension_semantics=("parallel", "arbitrary"),
            vmem_limit_bytes=vmem_limit,
        ),
    )(value,
      params["w_v"].astype(jnp.bfloat16), params["b_v"].reshape(1, E),
      params["w_o"].astype(jnp.bfloat16), params["b_o"].reshape(1, E))


# ---------------------------- MultiheadAttention ---------------------------- #
def multihead_attention(query, key, value, params, n_heads, mask=True,
                        causal=False):
    B, S, E = query.shape
    assert E % n_heads == 0, "embed_dim must be divisible by n_heads"
    vmem_limit = _vmem_limit_bytes()
    if mask:
        # mask=True overwrites the scaled QK^T scores with the fixed
        # lower-triangular (0 / -1e20) matrix whose softmax is the
        # prefix-uniform averaging matrix, so (for any `causal`, since
        # exp(-1e20) = exp(-10000) = 0 in f32) the forward collapses to
        #     out = W_o( prefix_mean_over_S( W_v(value) ) )
        # and the Q/K projections + QK^T + softmax are dead compute.
        return _masked_forward(value, params, vmem_limit)
    return _flash_forward(query, key, value, params, n_heads, causal,
                          vmem_limit)
    # NOTE: self.dropout is defined in __init__ but never applied in forward().


# --------------------------------- Reference -------------------------------- #
def reference(query, key, value, params, n_heads, mask=True, causal=False):
    B, S, E = query.shape
    d_k = E // n_heads

    def proj(x, w, b):
        y = x.reshape(B * S, E) @ w.T + b
        return y.reshape(B, S, n_heads, d_k).transpose(0, 2, 1, 3)

    q = proj(query, params["w_q"], params["b_q"])
    k = proj(key, params["w_k"], params["b_k"])
    v = proj(value, params["w_v"], params["b_v"])
    scores = jnp.einsum("bhqd,bhkd->bhqk", q, k) / math.sqrt(d_k)
    row = jnp.arange(S)[:, None]
    col = jnp.arange(S)[None, :]
    if mask:
        scores = jnp.broadcast_to(jnp.where(row >= col, 0.0, -1e20),
                                  scores.shape)
    if causal:
        scores = jnp.where(col > row, -10000.0, scores)
    p = jax.nn.softmax(scores, axis=-1)
    r = jnp.einsum("bhqk,bhkd->bhqd", p, v)
    r = r.transpose(0, 2, 1, 3).reshape(B * S, E)
    return (r @ params["w_o"].T + params["b_o"]).reshape(B, S, E)


if __name__ == "__main__":
    B, S, E, H = 2, 8, 32, 4
    root = jax.random.PRNGKey(0)
    ks = jax.random.split(root, 12)
    bound = 1.0 / math.sqrt(E)

    def u(k, shape):
        return jax.random.uniform(k, shape, jnp.float32, -bound, bound)

    params = {
        "w_q": u(ks[0], (E, E)), "b_q": u(ks[1], (E,)),
        "w_k": u(ks[2], (E, E)), "b_k": u(ks[3], (E,)),
        "w_v": u(ks[4], (E, E)), "b_v": u(ks[5], (E,)),
        "w_o": u(ks[6], (E, E)), "b_o": u(ks[7], (E,)),
    }
    query = jax.random.normal(ks[8], (B, S, E), jnp.float32)
    key_in = jax.random.normal(ks[9], (B, S, E), jnp.float32)
    value = jax.random.normal(ks[10], (B, S, E), jnp.float32)

    # Kernels run matmuls with bf16 operands (f32 accumulation), so the
    # pure-f32 reference gets a bf16-level tolerance.
    TOL = dict(atol=3e-2, rtol=3e-2)

    # 1) Default module path: mask=True (fixed prefix-average attention).
    out_m = multihead_attention(query, key_in, value, params, H, mask=True)
    jax.block_until_ready(out_m)
    ref_m = reference(query, key_in, value, params, H, mask=True)
    assert out_m.shape == (B, S, E)
    assert jnp.allclose(out_m, ref_m, **TOL), "mask=True mismatch"

    # 2) mask=False with distinct q/k/v (flash path, non-causal).
    out_u = multihead_attention(query, key_in, value, params, H, mask=False)
    jax.block_until_ready(out_u)
    ref_u = reference(query, key_in, value, params, H, mask=False)
    assert jnp.allclose(out_u, ref_u, **TOL), "mask=False mismatch"

    # 3) mask=False, causal=True, self-attention (tests the KV-tile skip).
    out_c = multihead_attention(query, query, query, params, H, mask=False,
                                causal=True)
    jax.block_until_ready(out_c)
    ref_c = reference(query, query, query, params, H, mask=False, causal=True)
    assert jnp.allclose(out_c, ref_c, **TOL), "causal mismatch"

    print("KERNEL_OK")
</pallas_src>

<mosaic_0001>
module attributes {stable_mosaic.version = 11 : i64} {
  func.func @_masked_mha_kernel(%arg0: i32, %arg1: i32, %arg2: memref<1x8x32xf32, #tpu.memory_space<vmem>>, %arg3: memref<32x32xbf16, #tpu.memory_space<vmem>>, %arg4: memref<1x32xf32, #tpu.memory_space<vmem>>, %arg5: memref<32x32xbf16, #tpu.memory_space<vmem>>, %arg6: memref<1x32xf32, #tpu.memory_space<vmem>>, %arg7: memref<1x8x32xf32, #tpu.memory_space<vmem>>, %arg8: memref<1x32xf32, #tpu.memory_space<vmem>>) attributes {dimension_semantics = [#tpu.dimension_semantics<parallel>, #tpu.dimension_semantics<arbitrary>], iteration_bounds = array<i64: 2, 1>, scalar_prefetch = 0 : i64, scratch_operands = 1 : i64, tpu.core_type = #tpu.core_type<tc>, window_params = [{transform_indices = @transform_0, window_bounds = array<i64: 1, 8, 32>}, {pipeline_mode = #tpu.pipeline_mode<synchronous>, transform_indices = @transform_1, window_bounds = array<i64: 32, 32>}, {pipeline_mode = #tpu.pipeline_mode<synchronous>, transform_indices = @transform_2, window_bounds = array<i64: 1, 32>}, {pipeline_mode = #tpu.pipeline_mode<synchronous>, transform_indices = @transform_3, window_bounds = array<i64: 32, 32>}, {pipeline_mode = #tpu.pipeline_mode<synchronous>, transform_indices = @transform_4, window_bounds = array<i64: 1, 32>}, {transform_indices = @transform_5, window_bounds = array<i64: 1, 8, 32>}]} {
    %c0_i32 = arith.constant 0 : i32
    %0 = arith.cmpi eq, %arg1, %c0_i32 : i32
    %1 = arith.extui %0 : i1 to i32
    %c0_i32_0 = arith.constant 0 : i32
    %2 = arith.cmpi ne, %1, %c0_i32_0 : i32
    scf.if %2 {
      %cst_20 = arith.constant 0.000000e+00 : f32
      %42 = vector.broadcast %cst_20 : f32 to vector<1x32xf32>
      %c0_21 = arith.constant 0 : index
      %c0_22 = arith.constant 0 : index
      %43 = vector.load %arg8[%c0_21, %c0_22] : memref<1x32xf32, #tpu.memory_space<vmem>>, vector<1x32xf32>
      tpu.vector_store %arg8[%c0_21, %c0_22], %42 {strides = array<i32>} : memref<1x32xf32, #tpu.memory_space<vmem>>, vector<1x32xf32>,
    } else {
    }
    %c0 = arith.constant 0 : index
    %c0_1 = arith.constant 0 : index
    %c0_2 = arith.constant 0 : index
    %3 = vector.load %arg2[%c0, %c0_1, %c0_2] : memref<1x8x32xf32, #tpu.memory_space<vmem>>, vector<1x8x32xf32>
    %4 = vector.shape_cast %3 : vector<1x8x32xf32> to vector<8x32xf32>
    %c0_3 = arith.constant 0 : index
    %c0_4 = arith.constant 0 : index
    %5 = vector.load %arg3[%c0_3, %c0_4] : memref<32x32xbf16, #tpu.memory_space<vmem>>, vector<32x32xbf16>
    %6 = arith.truncf %4 : vector<8x32xf32> to vector<8x32xbf16>
    %cst = arith.constant dense<0.000000e+00> : vector<8x32xf32>
    %7 = tpu.matmul %6, %5, %cst {dimension_numbers = #tpu.dot_dimension_numbers<[1], [1], [0], [0], [0, 0, 1, 0], [], []>} : vector<8x32xbf16>, vector<32x32xbf16>, vector<8x32xf32> -> vector<8x32xf32>
    %c0_5 = arith.constant 0 : index
    %c0_6 = arith.constant 0 : index
    %8 = vector.load %arg4[%c0_5, %c0_6] : memref<1x32xf32, #tpu.memory_space<vmem>>, vector<1x32xf32>
    %9 = vector.broadcast %8 : vector<1x32xf32> to vector<8x32xf32>
    %10 = arith.addf %7, %9 : vector<8x32xf32>
    %11 = tpu.iota {dimensions = array<i32: 0>} : vector<8x8xi32>
    %12 = tpu.iota {dimensions = array<i32: 1>} : vector<8x8xi32>
    %13 = arith.cmpi sle, %12, %11 : vector<8x8xi32>
    %14 = arith.extui %13 : vector<8x8xi1> to vector<8x8xi32>
    %15 = arith.sitofp %14 : vector<8x8xi32> to vector<8x8xf32>
    %16 = arith.truncf %15 : vector<8x8xf32> to vector<8x8xbf16>
    %17 = arith.truncf %10 : vector<8x32xf32> to vector<8x32xbf16>
    %cst_7 = arith.constant dense<0.000000e+00> : vector<8x32xf32>
    %18 = tpu.matmul %16, %17, %cst_7 {dimension_numbers = #tpu.dot_dimension_numbers<[1], [0], [0], [1], [0, 0, 1, 1], [], []>} : vector<8x8xbf16>, vector<8x32xbf16>, vector<8x32xf32> -> vector<8x32xf32>
    %c0_8 = arith.constant 0 : index
    %c0_9 = arith.constant 0 : index
    %19 = vector.load %arg8[%c0_8, %c0_9] : memref<1x32xf32, #tpu.memory_space<vmem>>, vector<1x32xf32>
    %20 = vector.broadcast %19 : vector<1x32xf32> to vector<8x32xf32>
    %21 = arith.addf %18, %20 : vector<8x32xf32>
    %22 = vector.extract_strided_slice %21 {offsets = [7, 0], sizes = [1, 32], strides = [1, 1]} : vector<8x32xf32> to vector<1x32xf32>
    %c0_10 = arith.constant 0 : index
    %c0_11 = arith.constant 0 : index
    %23 = vector.load %arg8[%c0_10, %c0_11] : memref<1x32xf32, #tpu.memory_space<vmem>>, vector<1x32xf32>
    tpu.vector_store %arg8[%c0_10, %c0_11], %22 {strides = array<i32>} : memref<1x32xf32, #tpu.memory_space<vmem>>, vector<1x32xf32>,
    %c8_i32 = arith.constant 8 : i32
    %24 = arith.muli %arg1, %c8_i32 : i32
    %25 = tpu.iota {dimensions = array<i32: 0>} : vector<8x1xi32>
    %26 = vector.broadcast %24 : i32 to vector<8x1xi32>
    %27 = arith.addi %26, %25 : vector<8x1xi32>
    %c1_i32 = arith.constant 1 : i32
    %28 = vector.broadcast %c1_i32 : i32 to vector<8x1xi32>
    %29 = arith.addi %27, %28 : vector<8x1xi32>
    %30 = arith.sitofp %29 : vector<8x1xi32> to vector<8x1xf32>
    %31 = vector.broadcast %30 : vector<8x1xf32> to vector<8x32xf32>
    %32 = arith.divf %21, %31 : vector<8x32xf32>
    %c0_12 = arith.constant 0 : index
    %c0_13 = arith.constant 0 : index
    %33 = vector.load %arg5[%c0_12, %c0_13] : memref<32x32xbf16, #tpu.memory_space<vmem>>, vector<32x32xbf16>
    %34 = arith.truncf %32 : vector<8x32xf32> to vector<8x32xbf16>
    %cst_14 = arith.constant dense<0.000000e+00> : vector<8x32xf32>
    %35 = tpu.matmul %34, %33, %cst_14 {dimension_numbers = #tpu.dot_dimension_numbers<[1], [1], [0], [0], [0, 0, 1, 0], [], []>} : vector<8x32xbf16>, vector<32x32xbf16>, vector<8x32xf32> -> vector<8x32xf32>
    %c0_15 = arith.constant 0 : index
    %c0_16 = arith.constant 0 : index
    %36 = vector.load %arg6[%c0_15, %c0_16] : memref<1x32xf32, #tpu.memory_space<vmem>>, vector<1x32xf32>
    %37 = vector.broadcast %36 : vector<1x32xf32> to vector<8x32xf32>
    %38 = arith.addf %35, %37 : vector<8x32xf32>
    %c0_17 = arith.constant 0 : index
    %c0_18 = arith.constant 0 : index
    %c0_19 = arith.constant 0 : index
    %39 = vector.load %arg7[%c0_17, %c0_18, %c0_19] : memref<1x8x32xf32, #tpu.memory_space<vmem>>, vector<1x8x32xf32>
    %40 = vector.shape_cast %39 : vector<1x8x32xf32> to vector<8x32xf32>
    %41 = vector.shape_cast %38 : vector<8x32xf32> to vector<1x8x32xf32>
    tpu.vector_store %arg7[%c0_17, %c0_18, %c0_19], %41 {strides = array<i32>} : memref<1x8x32xf32, #tpu.memory_space<vmem>>, vector<1x8x32xf32>,
    return
  }
  func.func @transform_0(%arg0: i32, %arg1: i32) -> (i32, i32, i32) {
    %c0_i32 = arith.constant 0 : i32
    %c0_i32_0 = arith.constant 0 : i32
    return %arg0, %arg1, %c0_i32 : i32, i32, i32
  }
  func.func @transform_1(%arg0: i32, %arg1: i32) -> (i32, i32) {
    %c0_i32 = arith.constant 0 : i32
    %c0_i32_0 = arith.constant 0 : i32
    %c0_i32_1 = arith.constant 0 : i32
    return %c0_i32, %c0_i32_0 : i32, i32
  }
  func.func @transform_2(%arg0: i32, %arg1: i32) -> (i32, i32) {
    %c0_i32 = arith.constant 0 : i32
    %c0_i32_0 = arith.constant 0 : i32
    %c0_i32_1 = arith.constant 0 : i32
    return %c0_i32, %c0_i32_0 : i32, i32
  }
  func.func @transform_3(%arg0: i32, %arg1: i32) -> (i32, i32) {
    %c0_i32 = arith.constant 0 : i32
    %c0_i32_0 = arith.constant 0 : i32
    %c0_i32_1 = arith.constant 0 : i32
    return %c0_i32, %c0_i32_0 : i32, i32
  }
  func.func @transform_4(%arg0: i32, %arg1: i32) -> (i32, i32) {
    %c0_i32 = arith.constant 0 : i32
    %c0_i32_0 = arith.constant 0 : i32
    %c0_i32_1 = arith.constant 0 : i32
    return %c0_i32, %c0_i32_0 : i32, i32
  }
  func.func @transform_5(%arg0: i32, %arg1: i32) -> (i32, i32, i32) {
    %c0_i32 = arith.constant 0 : i32
    %c0_i32_0 = arith.constant 0 : i32
    return %arg0, %arg1, %c0_i32 : i32, i32, i32
  }
}

</mosaic_0001>

<llo_original>
// kernel: tpu_custom_call.1
$region0: #{tpu_custom_call.1}
  #allocation0 [shape = 'u32[]', space=smem, size = 0x4, offset = 0x4, fixed_abs, tag = 'smem constant byte address 0x4 - core index']
  #allocation1 [shape = 'u32[144,128]{1,0:T(1,128)}', space=vmem, size = 0x12000, scoped, tag = 'internal scratch']
  #allocation2 [shape = 'f32[1,32]{1,0:T(1,128)}', space=vmem, size = 0x200, scoped, tag = 'scratch operand']
  %s0 = inlined_call_operand.hbm [shape: f32[2,8,32], index: 0, kind: input, shape index: {}]
  %s1 = inlined_call_operand.hbm [shape: bf16[32,32], index: 1, kind: input, shape index: {}]
  %s2 = inlined_call_operand.vmem [shape: f32[1,32], index: 2, kind: input, shape index: {}]
  %s3 = inlined_call_operand.hbm [shape: bf16[32,32], index: 3, kind: input, shape index: {}]
  %s4 = inlined_call_operand.vmem [shape: f32[1,32], index: 4, kind: input, shape index: {}]
  %s5 = inlined_call_operand.hbm [shape: f32[2,8,32], index: 5, kind: output, shape index: {}]
  %s6 = sld [smem:[#allocation0]]
  $region69: #{tpu_custom_call.1} parent=0
    _
  %s8 = ssub.s32 1, %s6
  %s9 = scalar_select 0, %s8, %s6
  $region1: #{tpu_custom_call.1} parent=0
    #allocation3 [shape = 'u8[8192]{0}', space=vmem, size = 0x2000, scoped, tag = 'input window, operand 0']
    #allocation4 [shape = 's32[2]{0}', space=sflag, size = 0x8, scoped, tag = 'scoped memory for tpu_custom_call.1']
    #allocation5 [shape = 's32[2]{0}', space=sflag, size = 0x8, scoped, tag = 'scoped memory for tpu_custom_call.1']
    #allocation6 [shape = 'u8[8192]{0}', space=vmem, size = 0x2000, scoped, tag = 'input window, operand 1, single buffered']
    #allocation7 [shape = 's32[1]{0}', space=sflag, size = 0x4, scoped, tag = 'scoped memory for tpu_custom_call.1']
    #allocation8 [shape = 'u8[8192]{0}', space=vmem, size = 0x2000, scoped, tag = 'input window, operand 3, single buffered']
    #allocation9 [shape = 'u8[8192]{0}', space=vmem, size = 0x2000, scoped, tag = 'output window, operand 0']
    %10 = vsyncpa [#allocation4], 0
    %s11 = scalar_lea.sflag [#allocation4], 1
    %12 = vsyncpa %s11, 0
    %13 = vsyncpa [#allocation7], 0
    %14 = vsyncpa [#allocation5], 0
    %s15 = scalar_lea.sflag [#allocation5], 1
    %16 = vsyncpa %s15, 0
    loop: start=0, step=1, limit=4
    $region2: #{tpu_custom_call.1} parent=1 // loop_pre_header
      _
    $region3: #{tpu_custom_call.1} parent=1 // loop_header
      %s18 = sphi 0, %s22
      %p19 = scmp.ge.s32.totalorder %s18, 4
      %s25 = sphi 0, %s37
      %s26 = sphi 0, %s33
      %s27 = sphi 0, %s25
      %s28 = sphi 0, %s26
      %s29 = sphi 0, %s27
      %s30 = sphi 0, %s28
      %s42 = sphi 0, %s44
      %s45 = sphi 0, %s42
      %s46 = sphi 0, %s45
      %s62 = sphi 0, %s46
      %s66 = sphi 0, %s66
      %s68 = sphi 0, %s66
      %s69 = sphi 0, %s68
      %s83 = sphi 0, %s69
      %s87 = sphi 0, %s87
      %s89 = sphi 0, %s87
      %s90 = sphi 0, %s89
      %s104 = sphi 0, %s90
      %s108 = sphi 0, %s108
      %s110 = sphi 0, %s108
      %s111 = sphi 0, %s110
      %s125 = sphi 0, %s111
      %s129 = sphi 0, %s129
      %s131 = sphi 0, %s129
      %s132 = sphi 0, %s131
      %s146 = sphi 0, %s132
      %s154 = sphi 0, %s156
      %s157 = sphi 0, %s154
      %s158 = sphi 0, %s157
      %s174 = sphi 0, %s158
    $region4: #{tpu_custom_call.1} parent=1 // loop_header_branch
      %21 = sbr.rel (%p19) target = $region8
    $region5: #{tpu_custom_call.1} parent=1 // loop_body
      %s23 = ssub.s32 %s18, 1
      %s24 = ssub.s32 %s18, 2
      %s31 = sadd.s32 1, %s26
      %p32 = scmp.ge.s32.totalorder %s31, 1
      %s33 = scalar_select %p32, 0, %s31
      %s34 = sadd.s32 1, %s25
      %s35 = scalar_select %p32, %s34, %s25
      %p36 = scmp.ge.s32.totalorder %s35, 2
      %s37 = scalar_select %p36, 0, %s35
      %s38 = ssub.s32 %s25, %s37
      %s39 = ssub.s32 %s26, %s33
      %s40 = sor.u32 %s38, %s39
      %p41 = scmp.eq.s32.totalorder %s40, 0
      %s43 = sadd.s32 %s42, 1
      %s44 = scalar_select %p41, %s42, %s43
      %p47 = pneg %p41
      %p48 = scmp.eq.s32.totalorder %s18, 1
      %p49 = por %p47, %p48
      %p50 = scmp.ne.s32.totalorder %s42, %s45
      %p51 = scmp.eq.s32.totalorder %s18, 0
      %p52 = por %p50, %p51
      %p53 = scmp.ne.s32.totalorder %s42, %s45
      %p54 = scmp.eq.s32.totalorder %s23, 1
      %p55 = por %p53, %p54
      %p56 = scmp.ne.s32.totalorder %s45, %s46
      %p57 = scmp.eq.s32.totalorder %s23, 0
      %p58 = por %p56, %p57
      %p59 = scmp.ne.s32.totalorder %s45, %s46
      %p60 = scmp.eq.s32.totalorder %s24, 1
      %p61 = por %p59, %p60
      %p63 = scmp.ne.s32.totalorder %s46, %s62
      %p64 = scmp.eq.s32.totalorder %s24, 0
      %p65 = por %p63, %p64
      %s67 = sadd.s32 %s66, 1
      %p70 = scmp.eq.s32.totalorder %s18, 1
      %p71 = scmp.ne.s32.totalorder %s66, %s68
      %p72 = scmp.eq.s32.totalorder %s18, 0
      %p73 = por %p71, %p72
      %p74 = scmp.ne.s32.totalorder %s66, %s68
      %p75 = scmp.eq.s32.totalorder %s23, 1
      %p76 = por %p74, %p75
      %p77 = scmp.ne.s32.totalorder %s68, %s69
      %p78 = scmp.eq.s32.totalorder %s23, 0
      %p79 = por %p77, %p78
      %p80 = scmp.ne.s32.totalorder %s68, %s69
      %p81 = scmp.eq.s32.totalorder %s24, 1
      %p82 = por %p80, %p81
      %p84 = scmp.ne.s32.totalorder %s69, %s83
      %p85 = scmp.eq.s32.totalorder %s24, 0
      %p86 = por %p84, %p85
      %s88 = sadd.s32 %s87, 1
      %p91 = scmp.eq.s32.totalorder %s18, 1
      %p92 = scmp.ne.s32.totalorder %s87, %s89
      %p93 = scmp.eq.s32.totalorder %s18, 0
      %p94 = por %p92, %p93
      %p95 = scmp.ne.s32.totalorder %s87, %s89
      %p96 = scmp.eq.s32.totalorder %s23, 1
      %p97 = por %p95, %p96
      %p98 = scmp.ne.s32.totalorder %s89, %s90
      %p99 = scmp.eq.s32.totalorder %s23, 0
      %p100 = por %p98, %p99
      %p101 = scmp.ne.s32.totalorder %s89, %s90
      %p102 = scmp.eq.s32.totalorder %s24, 1
      %p103 = por %p101, %p102
      %p105 = scmp.ne.s32.totalorder %s90, %s104
      %p106 = scmp.eq.s32.totalorder %s24, 0
      %p107 = por %p105, %p106
      %s109 = sadd.s32 %s108, 1
      %p112 = scmp.eq.s32.totalorder %s18, 1
      %p113 = scmp.ne.s32.totalorder %s108, %s110
      %p114 = scmp.eq.s32.totalorder %s18, 0
      %p115 = por %p113, %p114
      %p116 = scmp.ne.s32.totalorder %s108, %s110
      %p117 = scmp.eq.s32.totalorder %s23, 1
      %p118 = por %p116, %p117
      %p119 = scmp.ne.s32.totalorder %s110, %s111
      %p120 = scmp.eq.s32.totalorder %s23, 0
      %p121 = por %p119, %p120
      %p122 = scmp.ne.s32.totalorder %s110, %s111
      %p123 = scmp.eq.s32.totalorder %s24, 1
      %p124 = por %p122, %p123
      %p126 = scmp.ne.s32.totalorder %s111, %s125
      %p127 = scmp.eq.s32.totalorder %s24, 0
      %p128 = por %p126, %p127
      %s130 = sadd.s32 %s129, 1
      %p133 = scmp.eq.s32.totalorder %s18, 1
      %p134 = scmp.ne.s32.totalorder %s129, %s131
      %p135 = scmp.eq.s32.totalorder %s18, 0
      %p136 = por %p134, %p135
      %p137 = scmp.ne.s32.totalorder %s129, %s131
      %p138 = scmp.eq.s32.totalorder %s23, 1
      %p139 = por %p137, %p138
      %p140 = scmp.ne.s32.totalorder %s131, %s132
      %p141 = scmp.eq.s32.totalorder %s23, 0
      %p142 = por %p140, %p141
      %p143 = scmp.ne.s32.totalorder %s131, %s132
      %p144 = scmp.eq.s32.totalorder %s24, 1
      %p145 = por %p143, %p144
      %p147 = scmp.ne.s32.totalorder %s132, %s146
      %p148 = scmp.eq.s32.totalorder %s24, 0
      %p149 = por %p147, %p148
      %s150 = ssub.s32 %s25, %s37
      %s151 = ssub.s32 %s26, %s33
      %s152 = sor.u32 %s150, %s151
      %p153 = scmp.eq.s32.totalorder %s152, 0
      %s155 = sadd.s32 %s154, 1
      %s156 = scalar_select %p153, %s154, %s155
      %p159 = pneg %p153
      %p160 = scmp.eq.s32.totalorder %s18, 1
      %p161 = por %p159, %p160
      %p162 = scmp.ne.s32.totalorder %s154, %s157
      %p163 = scmp.eq.s32.totalorder %s18, 0
      %p164 = por %p162, %p163
      %p165 = scmp.ne.s32.totalorder %s154, %s157
      %p166 = scmp.eq.s32.totalorder %s23, 1
      %p167 = por %p165, %p166
      %p168 = scmp.ne.s32.totalorder %s157, %s158
      %p169 = scmp.eq.s32.totalorder %s23, 0
      %p170 = por %p168, %p169
      %p171 = scmp.ne.s32.totalorder %s157, %s158
      %p172 = scmp.eq.s32.totalorder %s24, 1
      %p173 = por %p171, %p172
      %p175 = scmp.ne.s32.totalorder %s158, %s174
      %p176 = scmp.eq.s32.totalorder %s24, 0
      %p177 = por %p175, %p176
      %p178 = scmp.le.s32.totalorder 1, %s18
      %p179 = scmp.lt.s32.totalorder %s18, 3
      %p180 = pnand %p178, %p179
      %p181 = pneg %p180
      // Predicated region
      $region9: #{tpu_custom_call.1} parent=5 // pred_check
        _
      $region10: #{tpu_custom_call.1} parent=5 // pred_check_branch
        %183 = sbr.rel (%p180) target = $region12
      $region11: #{tpu_custom_call.1} parent=5 // pred_region
        %s184 = ssub.s32 %s18, 1
        // Predicated region
        $region13: #{tpu_custom_call.1} parent=11 // pred_check
          %p185 = pneg %p79
        $region14: #{tpu_custom_call.1} parent=11 // pred_check_branch
          %187 = sbr.rel (%p185) target = $region16
        $region15: #{tpu_custom_call.1} parent=11 // pred_region
          %s189 = ssub.s32 256, 256
          %190 = vsyncadd [#allocation7], %s189
          %s191 = sshll.u32 [#allocation6], 4
          %s192 = int_to_ptr.vmem [resolvable:$true] %s191
          %197 = dma.hbm_to_vmem [thread:$0]  %s1, 256, %s192, [#allocation7], 64, 64, 4
        $region16: #{tpu_custom_call.1} parent=11 // pred_fallthru
          _
        // Predicated region
        $region17: #{tpu_custom_call.1} parent=11 // pred_check
          %p198 = pneg %p100
        $region18: #{tpu_custom_call.1} parent=11 // pred_check_branch
          %200 = sbr.rel (%p198) target = $region20
        $region19: #{tpu_custom_call.1} parent=11 // pred_region
          _
        $region20: #{tpu_custom_call.1} parent=11 // pred_fallthru
          _
        // Predicated region
        $region21: #{tpu_custom_call.1} parent=11 // pred_check
          %p201 = pneg %p121
        $region22: #{tpu_custom_call.1} parent=11 // pred_check_branch
          %203 = sbr.rel (%p201) target = $region24
        $region23: #{tpu_custom_call.1} parent=11 // pred_region
          %s205 = ssub.s32 256, 256
          %206 = vsyncadd [#allocation7], %s205
          %s207 = sshll.u32 [#allocation8], 4
          %s208 = int_to_ptr.vmem [resolvable:$true] %s207
          %213 = dma.hbm_to_vmem [thread:$0]  %s3, 256, %s208, [#allocation7], 64, 64, 4
        $region24: #{tpu_custom_call.1} parent=11 // pred_fallthru
          _
        // Predicated region
        $region25: #{tpu_custom_call.1} parent=11 // pred_check
          %p214 = pneg %p142
        $region26: #{tpu_custom_call.1} parent=11 // pred_check_branch
          %216 = sbr.rel (%p214) target = $region28
        $region27: #{tpu_custom_call.1} parent=11 // pred_region
          _
        $region28: #{tpu_custom_call.1} parent=11 // pred_fallthru
          _
      $region12: #{tpu_custom_call.1} parent=5 // pred_fallthru
        _
      %p217 = scmp.lt.s32.totalorder %s18, 2
      // Predicated region
      $region29: #{tpu_custom_call.1} parent=5 // pred_check
        %p218 = pneg %p217
      $region30: #{tpu_custom_call.1} parent=5 // pred_check_branch
        %220 = sbr.rel (%p218) target = $region32
      $region31: #{tpu_custom_call.1} parent=5 // pred_region
        // Predicated region
        $region33: #{tpu_custom_call.1} parent=31 // pred_check
          %p221 = pneg %p52
        $region34: #{tpu_custom_call.1} parent=31 // pred_check_branch
          %223 = sbr.rel (%p221) target = $region36
        $region35: #{tpu_custom_call.1} parent=31 // pred_region
          %s224 = sand.u32 %s42, 1
          %s225 = scalar_lea.sflag [#allocation4], %s224
          %s226 = sand.u32 %s42, 1
          %s227 = smul.addr %s226, 8
          %s228 = scalar_lea.vmem [#allocation3], %s227
          %s230 = ssub.s32 128, 128
          %231 = vsyncadd %s225, %s230
          %s232 = sadd.s32 %s26, %s25
          %s233 = smul.addr %s232, 128
          %s234 = scalar_lea.hbm %s0, %s233
          %s236 = sshll.u32 %s228, 4
          %s237 = int_to_ptr.vmem [resolvable:$true] %s236
          %239 = dma.hbm_to_vmem [thread:$0]  %s234, 128, %s237, %s225
        $region36: #{tpu_custom_call.1} parent=31 // pred_fallthru
          _
      $region32: #{tpu_custom_call.1} parent=5 // pred_fallthru
        _
      %p240 = scmp.le.s32.totalorder 1, %s18
      %p241 = scmp.lt.s32.totalorder %s18, 3
      %p242 = pnand %p240, %p241
      %p243 = pneg %p242
      // Predicated region
      $region37: #{tpu_custom_call.1} parent=5 // pred_check
        _
      $region38: #{tpu_custom_call.1} parent=5 // pred_check_branch
        %245 = sbr.rel (%p242) target = $region40
      $region39: #{tpu_custom_call.1} parent=5 // pred_region
        %s246 = ssub.s32 %s18, 1
        %s247 = sand.u32 %s45, 1
        %s248 = scalar_lea.sflag [#allocation4], %s247
        %s249 = sand.u32 %s45, 1
        %s250 = smul.addr %s249, 8
        %s251 = scalar_lea.vmem [#allocation3], %s250
        // Predicated region
        $region41: #{tpu_custom_call.1} parent=39 // pred_check
          %p252 = pneg %p58
        $region42: #{tpu_custom_call.1} parent=39 // pred_check_branch
          %254 = sbr.rel (%p252) target = $region44
        $region43: #{tpu_custom_call.1} parent=39 // pred_region
          %255 = dma.done %s248, 128
        $region44: #{tpu_custom_call.1} parent=39 // pred_fallthru
          _
        // Predicated region
        $region45: #{tpu_custom_call.1} parent=39 // pred_check
          %p256 = pneg %p79
        $region46: #{tpu_custom_call.1} parent=39 // pred_check_branch
          %258 = sbr.rel (%p256) target = $region48
        $region47: #{tpu_custom_call.1} parent=39 // pred_region
          %259 = dma.done [#allocation7], 256
        $region48: #{tpu_custom_call.1} parent=39 // pred_fallthru
          _
        // Predicated region
        $region49: #{tpu_custom_call.1} parent=39 // pred_check
          %p260 = pneg %p121
        $region50: #{tpu_custom_call.1} parent=39 // pred_check_branch
          %262 = sbr.rel (%p260) target = $region52
        $region51: #{tpu_custom_call.1} parent=39 // pred_region
          %263 = dma.done [#allocation7], 256
        $region52: #{tpu_custom_call.1} parent=39 // pred_fallthru
          _
        %s264 = sand.u32 %s45, 1
        %s265 = scalar_lea.sflag [#allocation4], %s264
        %s266 = sand.u32 %s45, 1
        %s267 = smul.addr %s266, 8
        %s268 = scalar_lea.vmem [#allocation3], %s267
        %p269 = pneg %p58
        %p270 = pneg %p55
        %p271 = pneg %p79
        %p272 = pneg %p76
        %p273 = pneg %p100
        %p274 = pneg %p97
        %p275 = pneg %p121
        %p276 = pneg %p118
        %p277 = pneg %p142
        %p278 = pneg %p139
        %p279 = pneg %p170
        %p280 = pneg %p167
        %s281 = sand.u32 %s157, 1
        %s282 = scalar_lea.sflag [#allocation5], %s281
        %s283 = sand.u32 %s157, 1
        %s284 = smul.addr %s283, 8
        %s285 = scalar_lea.vmem [#allocation9], %s284
        %p287 = scmp.eq.s32.totalorder %s28, 0
        // Predicated region
        $region53: #{tpu_custom_call.1} parent=39 // pred_check
          %p288 = pneg %p287
        $region54: #{tpu_custom_call.1} parent=39 // pred_check_branch
          %290 = sbr.rel (%p288) target = $region56
        $region55: #{tpu_custom_call.1} parent=39 // pred_region
          %vm291 = vcmask 253952
          %292 = vst.msk [vmem:[#allocation2] sm:$0x1] %vm291, 0.0
        $region56: #{tpu_custom_call.1} parent=39 // pred_fallthru
          _
        %v293 = vld [vmem:[%s251] sm:$0xff]
        %v294 = vld [vmem:[#allocation6] sm:$0xf]
        %v295 = vld [vmem:[#allocation6 + $0x4] sm:$0xf]
        %v296 = vld [vmem:[#allocation6 + $0x8] sm:$0xf]
        %v297 = vld [vmem:[#allocation6 + $0xc] sm:$0xf]
        %v298 = vpack.c.bf16 %v293, %v293
        %v299 = vld [vmem:[%s2] sm:$0x1]
        %v301 = vlaneseq
        %v302 = vshrl.u32 %v301, 7
        %v303 = vsub.s32 0, %v302
        %v304 = vrot.slane %v299, %v303
        %v310 = vunpack.c.l.b16 %v294
        %v311 = vunpack.c.l.b16 %v295
        %v312 = vunpack.c.l.b16 %v296
        %v313 = vunpack.c.l.b16 %v297
        %v314 = vpack.c.b16 %v311, %v310
        %v315 = vpack.c.b16 %v313, %v312
        %vm316 = vcmask 261120
        %v318 = vsel %vm316, %v298, 0
        %v321 = vsel %vm316, %v314, 0
        %v324 = vsel %vm316, %v315, 0
        %326 = vmatprep.subr.bf16.mxu0 0
        %327 = vmatpush1.bf16.xpose.msra.mxu0 %v321
        %328 = vmatprep.subr.bf16.mxu0 0
        %329 = vmatpush1.bf16.xpose.msra.mxu0 %v324
        %330 = vmatprep.subr.bf16.mxu0 0
        %331 = vmatpush1.bf16.xpose.msra.mxu0 0
        %332 = vmatprep.subr.bf16.mxu0 0
        %333 = vmatpush1.bf16.xpose.msra.mxu0 0
        %334 = vmatprep.subr.bf16.mxu0 0
        %335 = vmatpush1.bf16.xpose.msra.mxu0 0
        %336 = vmatprep.subr.bf16.mxu0 0
        %337 = vmatpush1.bf16.xpose.msra.mxu0 0
        %338 = vmatprep.subr.bf16.mxu0 0
        %339 = vmatpush1.bf16.xpose.msra.mxu0 0
        %340 = vmatprep.subr.bf16.mxu0 0
        %341 = vmatpush1.bf16.xpose.msra.mxu0 0
        %342 = vmatprep.subr.bf16.mxu0 0
        %343 = vmatpush1.bf16.xpose.msra.mxu0 0
        %344 = vmatprep.subr.bf16.mxu0 0
        %345 = vmatpush1.bf16.xpose.msra.mxu0 0
        %346 = vmatprep.subr.bf16.mxu0 0
        %347 = vmatpush1.bf16.xpose.msra.mxu0 0
        %348 = vmatprep.subr.bf16.mxu0 0
        %349 = vmatpush1.bf16.xpose.msra.mxu0 0
        %350 = vmatprep.subr.bf16.mxu0 0
        %351 = vmatpush1.bf16.xpose.msra.mxu0 0
        %352 = vmatprep.subr.bf16.mxu0 0
        %353 = vmatpush1.bf16.xpose.msra.mxu0 0
        %354 = vmatprep.subr.bf16.mxu0 0
        %355 = vmatpush1.bf16.xpose.msra.mxu0 0
        %356 = vmatprep.subr.bf16.mxu0 0
        %357 = vmatpush1.bf16.xpose.msra.mxu0 0
        %358 = vmatprep.mubr.bf16.mxu0 0
        %359 = vmatmul.mubr.bf16.gmra.mrb[0].mxu0 %v318
        %v360 = vpop.f32.mrb[0].mxu0
        %v361 = vadd.f32 %v304, %v360
        %v362 = vpop.f32.mrb[0].mxu0
        %v363 = vpop.f32.mrb[0].mxu0
        %v364 = vpop.f32.mrb[0].mxu0
        %365 = vdwg.mxu0
        %v366 = vlaneseq
        %v367 = vshrl.u32 %v366, 7
        %v368 = vlaneseq
        %v369 = vand.u32 %v368, 127
        %vm370 = vcmp.le.s32.totalorder %v369, %v367
        %v371 = vsel %vm370, 1, 0
        %v372 = vcvt.s32.f32 %v371
        %v373 = vpack.c.bf16 %v372, %v372
        %v374 = vpack.c.bf16 %v361, %v361
        %v375 = vld [vmem:[#allocation2] sm:$0x1]
        %v377 = vlaneseq
        %v378 = vshrl.u32 %v377, 7
        %v379 = vsub.s32 0, %v378
        %v380 = vrot.slane %v375, %v379
        %vm382 = vcmask 64512
        %v384 = vsel %vm382, %v373, 0
        %vm386 = vcmask 1043456
        %v388 = vsel %vm386, %v374, 0
        %390 = vmatprep.subr.bf16.mxu0 0
        %391 = vmatpush1.bf16.msra.mxu0 %v388
        %392 = vmatprep.subr.bf16.mxu0 0
        %393 = vmatpush1.bf16.msra.mxu0 0
        %394 = vmatprep.subr.bf16.mxu0 0
        %395 = vmatpush1.bf16.msra.mxu0 0
        %396 = vmatprep.subr.bf16.mxu0 0
        %397 = vmatpush1.bf16.msra.mxu0 0
        %398 = vmatprep.subr.bf16.mxu0 0
        %399 = vmatpush1.bf16.msra.mxu0 0
        %400 = vmatprep.subr.bf16.mxu0 0
        %401 = vmatpush1.bf16.msra.mxu0 0
        %402 = vmatprep.subr.bf16.mxu0 0
        %403 = vmatpush1.bf16.msra.mxu0 0
        %404 = vmatprep.subr.bf16.mxu0 0
        %405 = vmatpush1.bf16.msra.mxu0 0
        %406 = vmatprep.subr.bf16.mxu0 0
        %407 = vmatpush1.bf16.msra.mxu0 0
        %408 = vmatprep.subr.bf16.mxu0 0
        %409 = vmatpush1.bf16.msra.mxu0 0
        %410 = vmatprep.subr.bf16.mxu0 0
        %411 = vmatpush1.bf16.msra.mxu0 0
        %412 = vmatprep.subr.bf16.mxu0 0
        %413 = vmatpush1.bf16.msra.mxu0 0
        %414 = vmatprep.subr.bf16.mxu0 0
        %415 = vmatpush1.bf16.msra.mxu0 0
        %416 = vmatprep.subr.bf16.mxu0 0
        %417 = vmatpush1.bf16.msra.mxu0 0
        %418 = vmatprep.subr.bf16.mxu0 0
        %419 = vmatpush1.bf16.msra.mxu0 0
        %420 = vmatprep.subr.bf16.mxu0 0
        %421 = vmatpush1.bf16.msra.mxu0 0
        %422 = vmatprep.mubr.bf16.mxu0 0
        %423 = vmatmul.mubr.bf16.gmra.mrb[0].mxu0 %v384
        %v424 = vpop.f32.mrb[0].mxu0
        %v425 = vadd.f32 %v380, %v424
        %v426 = vpop.f32.mrb[0].mxu0
        %v427 = vpop.f32.mrb[0].mxu0
        %v428 = vpop.f32.mrb[0].mxu0
        %429 = vdwg.mxu0
        %vm430 = vcmask 261127
        %431 = vst.msk [vmem:[#allocation2 - $0x7] sm:$0x80] %vm430, %v425
        %s432 = smul.u32 %s28, 8
        %v433 = vstv %s432
        %v434 = vadd.s32 %v433, %v367
        %v435 = vadd.s32 %v434, 1
        %v436 = vcvt.s32.f32 %v435
        %v437 = vrcp.pop %v436
        %v438 = vmul.f32 %v425, %v437
        %v439 = vld [vmem:[#allocation8] sm:$0xf]
        %v440 = vld [vmem:[#allocation8 + $0x4] sm:$0xf]
        %v441 = vld [vmem:[#allocation8 + $0x8] sm:$0xf]
        %v442 = vld [vmem:[#allocation8 + $0xc] sm:$0xf]
        %v443 = vpack.c.bf16 %v438, %v438
        %v444 = vld [vmem:[%s4] sm:$0x1]
        %v446 = vlaneseq
        %v447 = vshrl.u32 %v446, 7
        %v448 = vsub.s32 0, %v447
        %v449 = vrot.slane %v444, %v448
        %v455 = vunpack.c.l.b16 %v439
        %v456 = vunpack.c.l.b16 %v440
        %v457 = vunpack.c.l.b16 %v441
        %v458 = vunpack.c.l.b16 %v442
        %v459 = vpack.c.b16 %v456, %v455
        %v460 = vpack.c.b16 %v458, %v457
        %v462 = vsel %vm316, %v443, 0
        %v465 = vsel %vm316, %v459, 0
        %v468 = vsel %vm316, %v460, 0
        %470 = vmatprep.subr.bf16.mxu0 0
        %471 = vmatpush1.bf16.xpose.msra.mxu0 %v465
        %472 = vmatprep.subr.bf16.mxu0 0
        %473 = vmatpush1.bf16.xpose.msra.mxu0 %v468
        %474 = vmatprep.subr.bf16.mxu0 0
        %475 = vmatpush1.bf16.xpose.msra.mxu0 0
        %476 = vmatprep.subr.bf16.mxu0 0
        %477 = vmatpush1.bf16.xpose.msra.mxu0 0
        %478 = vmatprep.subr.bf16.mxu0 0
        %479 = vmatpush1.bf16.xpose.msra.mxu0 0
        %480 = vmatprep.subr.bf16.mxu0 0
        %481 = vmatpush1.bf16.xpose.msra.mxu0 0
        %482 = vmatprep.subr.bf16.mxu0 0
        %483 = vmatpush1.bf16.xpose.msra.mxu0 0
        %484 = vmatprep.subr.bf16.mxu0 0
        %485 = vmatpush1.bf16.xpose.msra.mxu0 0
        %486 = vmatprep.subr.bf16.mxu0 0
        %487 = vmatpush1.bf16.xpose.msra.mxu0 0
        %488 = vmatprep.subr.bf16.mxu0 0
        %489 = vmatpush1.bf16.xpose.msra.mxu0 0
        %490 = vmatprep.subr.bf16.mxu0 0
        %491 = vmatpush1.bf16.xpose.msra.mxu0 0
        %492 = vmatprep.subr.bf16.mxu0 0
        %493 = vmatpush1.bf16.xpose.msra.mxu0 0
        %494 = vmatprep.subr.bf16.mxu0 0
        %495 = vmatpush1.bf16.xpose.msra.mxu0 0
        %496 = vmatprep.subr.bf16.mxu0 0
        %497 = vmatpush1.bf16.xpose.msra.mxu0 0
        %498 = vmatprep.subr.bf16.mxu0 0
        %499 = vmatpush1.bf16.xpose.msra.mxu0 0
        %500 = vmatprep.subr.bf16.mxu0 0
        %501 = vmatpush1.bf16.xpose.msra.mxu0 0
        %502 = vmatprep.mubr.bf16.mxu0 0
        %503 = vmatmul.mubr.bf16.gmra.mrb[0].mxu0 %v462
        %v504 = vpop.f32.mrb[0].mxu0
        %v505 = vadd.f32 %v449, %v504
        %v506 = vpop.f32.mrb[0].mxu0
        %v507 = vpop.f32.mrb[0].mxu0
        %v508 = vpop.f32.mrb[0].mxu0
        %509 = vdwg.mxu0
        %510 = vst.msk [vmem:[%s285] sm:$0xff] %vm316, %v505
        %s511 = sand.u32 %s157, 1
        %s512 = scalar_lea.sflag [#allocation5], %s511
        %s513 = sand.u32 %s157, 1
        %s514 = smul.addr %s513, 8
        %s515 = scalar_lea.vmem [#allocation9], %s514
        // Predicated region
        $region57: #{tpu_custom_call.1} parent=39 // pred_check
          %p516 = pneg %p167
        $region58: #{tpu_custom_call.1} parent=39 // pred_check_branch
          %518 = sbr.rel (%p516) target = $region60
        $region59: #{tpu_custom_call.1} parent=39 // pred_region
          %s520 = ssub.s32 128, 128
          %521 = vsyncadd %s512, %s520
          %s522 = sadd.s32 %s28, %s27
          %s523 = smul.addr %s522, 128
          %s524 = scalar_lea.hbm %s5, %s523
          %s526 = sshll.u32 %s515, 4
          %s527 = int_to_ptr.vmem [resolvable:$true] %s526
          %529 = dma.vmem_to_hbm [thread:$0]  %s527, 128, %s524, %s512
        $region60: #{tpu_custom_call.1} parent=39 // pred_fallthru
          _
      $region40: #{tpu_custom_call.1} parent=5 // pred_fallthru
        _
      %p530 = scmp.le.s32.totalorder 2, %s18
      // Predicated region
      $region61: #{tpu_custom_call.1} parent=5 // pred_check
        %p531 = pneg %p530
      $region62: #{tpu_custom_call.1} parent=5 // pred_check_branch
        %533 = sbr.rel (%p531) target = $region64
      $region63: #{tpu_custom_call.1} parent=5 // pred_region
        %s534 = ssub.s32 %s18, 2
        // Predicated region
        $region65: #{tpu_custom_call.1} parent=63 // pred_check
          %p535 = pneg %p173
        $region66: #{tpu_custom_call.1} parent=63 // pred_check_branch
          %537 = sbr.rel (%p535) target = $region68
        $region67: #{tpu_custom_call.1} parent=63 // pred_region
          %s538 = sand.u32 %s158, 1
          %s539 = scalar_lea.sflag [#allocation5], %s538
          %s540 = sand.u32 %s158, 1
          %s541 = smul.addr %s540, 8
          %s542 = scalar_lea.vmem [#allocation9], %s541
          %543 = dma.done %s539, 128
        $region68: #{tpu_custom_call.1} parent=63 // pred_fallthru
          _
      $region64: #{tpu_custom_call.1} parent=5 // pred_fallthru
        _
    $region6: #{tpu_custom_call.1} parent=1 // loop_footer
      %s22 = sadd.s32 1, %s18
    $region7: #{tpu_custom_call.1} parent=1 // loop_footer_branch
      %17 = sbr.rel target = $region3
    $region8: #{tpu_custom_call.1} parent=1 // loop_exit
      _
    %544 = vsyncpa [#allocation4], 1
    %s545 = scalar_lea.sflag [#allocation4], 1
    %546 = vsyncpa %s545, 1
    %547 = vsyncpa [#allocation7], 1
    %548 = vsyncpa [#allocation5], 1
    %s549 = scalar_lea.sflag [#allocation5], 1
    %550 = vsyncpa %s549, 1

</llo_original>
